<compile_context>
chip_gen: v6e
topology: v6e:2x2x1
jax: 0.10.0
libtpu: 0.0.40
codegen_flags: <defaults>
</compile_context>

<pallas_src>
import jax
import jax.numpy as jnp
from jax.experimental import pallas as pl
from jax.experimental.pallas import tpu as pltpu

LANE = 128
SUBLANE = 8
VREG_ELEMS = LANE * SUBLANE          # 1024 f32 elements per vreg
MAX_TILE_COLS = 1024                 # lanes per tile (multiple of 128)
MAX_TILE_ROWS = 512                  # sublanes per tile (multiple of 8)


def rsub_kernel(scalar_ref, x_ref, o_ref):
    # torch.rsub(x, scalar) == scalar - x. Scalar is a single f32 in SMEM.
    s = scalar_ref[0]
    o_ref[...] = (s - x_ref[...].astype(jnp.float32)).astype(o_ref.dtype)


def _choose_layout(n):
    """Pick a lane-dense (rows, cols) layout and a row-tile for n elements."""
    n_pad = pl.cdiv(n, VREG_ELEMS) * VREG_ELEMS
    nv = n_pad // VREG_ELEMS                        # number of vregs
    # Widest column count (in 128-lane units, <= MAX_TILE_COLS) dividing nv.
    k = 1
    for d in range(min(nv, MAX_TILE_COLS // LANE), 0, -1):
        if nv % d == 0:
            k = d
            break
    cols = k * LANE
    rows = n_pad // cols                            # multiple of 8 by construction
    # Largest row-tile (multiple of 8, <= MAX_TILE_ROWS) that divides rows.
    tile_rows = SUBLANE
    t = min(rows, MAX_TILE_ROWS)
    while t >= SUBLANE:
        if rows % t == 0:
            tile_rows = t
            break
        t -= SUBLANE
    return n_pad, rows, cols, tile_rows


def pallas_rsub_scalar(x, scalar):
    """Elementwise scalar - x (torch.rsub semantics) via a Pallas TPU kernel."""
    orig_shape = x.shape
    n = x.size
    flat = x.reshape(-1)

    n_pad, rows, cols, tile_rows = _choose_layout(n)
    if n_pad != n:
        flat = jnp.pad(flat, (0, n_pad - n))        # tail-only pad when needed
    x2 = flat.reshape(rows, cols)

    scalar_arr = jnp.asarray(scalar, dtype=jnp.float32).reshape(1)

    out2 = pl.pallas_call(
        rsub_kernel,
        out_shape=jax.ShapeDtypeStruct((rows, cols), x.dtype),
        grid=(rows // tile_rows,),
        in_specs=[
            pl.BlockSpec(memory_space=pltpu.MemorySpace.SMEM),   # scalar in SMEM
            pl.BlockSpec((tile_rows, cols), lambda i: (i, 0)),   # x tile in VMEM
        ],
        out_specs=pl.BlockSpec((tile_rows, cols), lambda i: (i, 0)),
        compiler_params=pltpu.CompilerParams(
            dimension_semantics=("parallel",)
        ),
    )(scalar_arr, x2)

    out_flat = out2.reshape(-1)
    if n_pad != n:
        out_flat = out_flat[:n]
    return out_flat.reshape(orig_shape)


if __name__ == "__main__":
    key = jax.random.PRNGKey(0)
    shape = (2, 4, 16, 16)          # NCHW-like, consistent with the test module
    x = jax.random.normal(key, shape, dtype=jnp.float32)
    scalar = 2.5

    out = pallas_rsub_scalar(x, scalar)
    jax.block_until_ready(out)

    expected = scalar - x           # torch.rsub(x, scalar)
    assert out.shape == expected.shape
    assert jnp.allclose(out, expected, atol=1e-6, rtol=1e-6)
    print("KERNEL_OK")
</pallas_src>

<mosaic_0001>
module attributes {stable_mosaic.version = 11 : i64} {
  func.func @rsub_kernel(%arg0: i32, %arg1: memref<1xf32, #tpu.memory_space<smem>>, %arg2: memref<8x256xf32, #tpu.memory_space<vmem>>, %arg3: memref<8x256xf32, #tpu.memory_space<vmem>>) attributes {dimension_semantics = [#tpu.dimension_semantics<parallel>], iteration_bounds = array<i64: 1>, scalar_prefetch = 0 : i64, scratch_operands = 0 : i64, tpu.core_type = #tpu.core_type<tc>, window_params = [{transform_indices = @transform_0, window_bounds = array<i64: 1>}, {transform_indices = @transform_1, window_bounds = array<i64: 8, 256>}, {transform_indices = @transform_2, window_bounds = array<i64: 8, 256>}]} {
    %c0 = arith.constant 0 : index
    %0 = memref.load %arg1[%c0] : memref<1xf32, #tpu.memory_space<smem>>
    %c0_0 = arith.constant 0 : index
    %c0_1 = arith.constant 0 : index
    %1 = vector.load %arg2[%c0_0, %c0_1] : memref<8x256xf32, #tpu.memory_space<vmem>>, vector<8x256xf32>
    %2 = vector.broadcast %0 : f32 to vector<8x256xf32>
    %3 = arith.subf %2, %1 : vector<8x256xf32>
    %c0_2 = arith.constant 0 : index
    %c0_3 = arith.constant 0 : index
    %4 = vector.load %arg3[%c0_2, %c0_3] : memref<8x256xf32, #tpu.memory_space<vmem>>, vector<8x256xf32>
    tpu.vector_store %arg3[%c0_2, %c0_3], %3 {strides = array<i32>} : memref<8x256xf32, #tpu.memory_space<vmem>>, vector<8x256xf32>,
    return
  }
  func.func @transform_0(%arg0: i32) -> i32 {
    %c0_i32 = arith.constant 0 : i32
    %c0_i32_0 = arith.constant 0 : i32
    return %c0_i32 : i32
  }
  func.func @transform_1(%arg0: i32) -> (i32, i32) {
    %c0_i32 = arith.constant 0 : i32
    %c0_i32_0 = arith.constant 0 : i32
    return %arg0, %c0_i32 : i32, i32
  }
  func.func @transform_2(%arg0: i32) -> (i32, i32) {
    %c0_i32 = arith.constant 0 : i32
    %c0_i32_0 = arith.constant 0 : i32
    return %arg0, %c0_i32 : i32, i32
  }
}

</mosaic_0001>

<llo_original>
// kernel: tpu_custom_call.1
$region0: #{tpu_custom_call.1}
  #allocation0 [shape = 'u32[]', space=smem, size = 0x4, offset = 0x4, fixed_abs, tag = 'smem constant byte address 0x4 - core index']
  #allocation1 [shape = 'u32[144,128]{1,0:T(1,128)}', space=vmem, size = 0x12000, scoped, tag = 'internal scratch']
  #allocation2 [shape = 'f32[1]{0:T(128)S(6)}', space=smem, size = 0x200, scoped, tag = 'scoped memory for tpu_custom_call.1']
  %s0 = inlined_call_operand.<no memory space> [shape: f32[1], index: 0, kind: input, shape index: {}]
  %s1 = inlined_call_operand.hbm [shape: f32[8,256], index: 1, kind: input, shape index: {}]
  %s2 = inlined_call_operand.hbm [shape: f32[8,256], index: 2, kind: output, shape index: {}]
  %s3 = sld [smem:[#allocation0]]
  $region22: #{tpu_custom_call.1} parent=0
    _
  %s5 = ssub.s32 1, %s3
  %s6 = scalar_select 0, %s5, %s3
  %7 = sst [smem:[#allocation2]] %s0
  $region1: #{tpu_custom_call.1} parent=0
    #allocation3 [shape = 'u8[8192]{0}', space=vmem, size = 0x2000, scoped, tag = 'input window, operand 1, single buffered']
    #allocation4 [shape = 's32[1]{0}', space=sflag, size = 0x4, scoped, tag = 'scoped memory for tpu_custom_call.1']
    #allocation5 [shape = 's32[1]{0}', space=sflag, size = 0x4, scoped, tag = 'scoped memory for tpu_custom_call.1']
    #allocation6 [shape = 'u8[8192]{0}', space=vmem, size = 0x2000, scoped, tag = 'output window, operand 0, single buffered']
    %8 = vsyncpa [#allocation4], 0
    %9 = vsyncpa [#allocation5], 0
    // Predicated region
    $region2: #{tpu_custom_call.1} parent=1 // pred_check
      _
    $region3: #{tpu_custom_call.1} parent=1 // pred_check_branch
      %11 = sbr.rel (0) target = $region5
    $region4: #{tpu_custom_call.1} parent=1 // pred_region
      _
    $region5: #{tpu_custom_call.1} parent=1 // pred_fallthru
      _
    // Predicated region
    $region6: #{tpu_custom_call.1} parent=1 // pred_check
      _
    $region7: #{tpu_custom_call.1} parent=1 // pred_check_branch
      %13 = sbr.rel (0) target = $region9
    $region8: #{tpu_custom_call.1} parent=1 // pred_region
      %s15 = ssub.s32 256, 256
      %16 = vsyncadd [#allocation4], %s15
      %s18 = sshll.u32 [#allocation3], 4
      %s19 = int_to_ptr.vmem [resolvable:$true] %s18
      %21 = dma.hbm_to_vmem [thread:$0]  %s1, 256, %s19, [#allocation4]
    $region9: #{tpu_custom_call.1} parent=1 // pred_fallthru
      _
    // Predicated region
    $region10: #{tpu_custom_call.1} parent=1 // pred_check
      _
    $region11: #{tpu_custom_call.1} parent=1 // pred_check_branch
      %23 = sbr.rel (0) target = $region13
    $region12: #{tpu_custom_call.1} parent=1 // pred_region
      %24 = dma.done [#allocation4], 256
    $region13: #{tpu_custom_call.1} parent=1 // pred_fallthru
      _
    %s25 = sld [smem:[#allocation2]]
    %v26 = vld [vmem:[#allocation3] sm:$0xff]
    %v27 = vld [vmem:[#allocation3 + $0x8] sm:$0xff]
    %v28 = vstv %s25
    %v29 = vsub.f32 %v28, %v26
    %v30 = vsub.f32 %v28, %v27
    %31 = vst [vmem:[#allocation6] sm:$0xff] %v29
    %32 = vst [vmem:[#allocation6 + $0x8] sm:$0xff] %v30
    // Predicated region
    $region14: #{tpu_custom_call.1} parent=1 // pred_check
      _
    $region15: #{tpu_custom_call.1} parent=1 // pred_check_branch
      %34 = sbr.rel (0) target = $region17
    $region16: #{tpu_custom_call.1} parent=1 // pred_region
      %s36 = ssub.s32 256, 256
      %37 = vsyncadd [#allocation5], %s36
      %s39 = sshll.u32 [#allocation6], 4
      %s40 = int_to_ptr.vmem [resolvable:$true] %s39
      %42 = dma.vmem_to_hbm [thread:$0]  %s40, 256, %s2, [#allocation5]
    $region17: #{tpu_custom_call.1} parent=1 // pred_fallthru
      _
    // Predicated region
    $region18: #{tpu_custom_call.1} parent=1 // pred_check
      _
    $region19: #{tpu_custom_call.1} parent=1 // pred_check_branch
      %44 = sbr.rel (0) target = $region21
    $region20: #{tpu_custom_call.1} parent=1 // pred_region
      %45 = dma.done [#allocation5], 256
    $region21: #{tpu_custom_call.1} parent=1 // pred_fallthru
      _
    %46 = vsyncpa [#allocation4], 1
    %47 = vsyncpa [#allocation5], 1

</llo_original>
